<compile_context>
chip_gen: v5e
topology: v5e:2x2
jax: 0.10.0
libtpu: 0.0.40
codegen_flags: <defaults>
</compile_context>

<pallas_src>
import jax
import jax.numpy as jnp
from jax.experimental import pallas as pl
from jax.experimental.pallas import tpu as pltpu

NUM_CONCEPTS = 10
FEAT_DIM = 512
HIDDEN_CP = 128    # concept_predictor hidden width (== lane width)
HIDDEN_CLS = 32    # classifier hidden width
LANE = 128         # TPU lane width; small dims are zero-padded up to this
LOGIT_LANE = NUM_CONCEPTS   # lane holding the classifier logit in the fused output

CONCEPT_NAMES = ['Consolidation', 'Cavitation', 'Fibrosis',
                 'Patchy/Consolidative Pattern', 'Upper Lobe Involvement',
                 'Pulmonary Opacities', 'Volume Loss', 'Architectural Distortion',
                 'Diverse Parenchymal Patterns', 'Normal']


def _cbm_kernel(pooled_ref,               # [TB, C]        bf16
                w_enc_ref,                # [C, 512]       bf16
                w1_ref,                   # [512, 128]     bf16
                w_stack_ref,              # [3, 128, 128]  bf16  (padded w2, w3, w4)
                bias_ref,                 # [4, 128]       f32   (b1, b2, b3, b4 rows)
                out_ref):                 # [TB, 128]      bf16: lanes 0..9 concepts, lane 10 logit
    # --- fused encoder projection (stand-in for the external SimCLR encoder) ---
    # torch.no_grad() only disables gradient tracking; forward values are identical.
    feat = jnp.dot(pooled_ref[...], w_enc_ref[...],
                   preferred_element_type=jnp.float32)                  # [TB, 512] f32 acc
    feat = jnp.maximum(feat, 0.0).astype(jnp.bfloat16)                  # single cast, bf16 live

    b1 = bias_ref[0:1, :]
    b2 = bias_ref[1:2, :]
    b3 = bias_ref[2:3, :]
    b4 = bias_ref[3:4, :]

    # --- concept_predictor: Linear(512,128) -> ReLU -> Linear(128,10) -> Sigmoid ---
    h1 = jnp.dot(feat, w1_ref[...], preferred_element_type=jnp.float32) + b1
    h1 = jnp.maximum(h1, 0.0).astype(jnp.bfloat16)                      # [TB, 128]

    c_logits = jnp.dot(h1, w_stack_ref[0],
                       preferred_element_type=jnp.float32) + b2         # [TB, 128]
    concepts = jax.nn.sigmoid(c_logits)        # lanes >= NUM_CONCEPTS hold sigmoid(0)=0.5 padding

    # --- classifier: Linear(10,32) -> ReLU -> Linear(32,1) ---
    # Padded rows of w3 (rows >= NUM_CONCEPTS) are zero, so 0.5 padding lanes contribute nothing.
    h2 = jnp.dot(concepts.astype(jnp.bfloat16), w_stack_ref[1],
                 preferred_element_type=jnp.float32) + b3
    h2 = jnp.maximum(h2, 0.0).astype(jnp.bfloat16)                      # [TB, 128]

    logits = jnp.dot(h2, w_stack_ref[2],
                     preferred_element_type=jnp.float32) + b4           # logit in lane LOGIT_LANE

    # Lane-dense fused output: concepts in lanes [0,10), logit in lane 10, zeros elsewhere.
    lane = jax.lax.broadcasted_iota(jnp.int32, (1, LANE), 1)            # tiny (1,128) mask source
    out = jnp.where(lane < NUM_CONCEPTS, concepts, logits)
    out_ref[...] = out.astype(out_ref.dtype)


def _round_up(x, m):
    return ((x + m - 1) // m) * m


def _vmem_bytes(tb, c):
    """Rough per-step VMEM footprint: double-buffered I/O + resident weights + intermediates."""
    bf16, f32 = 2, 4
    io = 2 * tb * c * bf16 + 2 * tb * LANE * bf16
    weights = (c * FEAT_DIM + FEAT_DIM * HIDDEN_CP + 3 * LANE * LANE) * bf16 + 4 * LANE * f32
    inter = tb * FEAT_DIM * (f32 + bf16) + 6 * tb * LANE * f32
    return io + weights + inter


_VMEM_SOFT_CAP = 40 * 1024 * 1024   # keep footprint well under v7x's 64 MiB physical VMEM


def _choose_tb(B, C, block_b):
    if B <= 8:
        return B                                   # full-dim batch block (tiling rule satisfied)
    # Aim for >= 2 grid steps so dimension_semantics=("parallel",) can use both v7x cores.
    tb = min(block_b, _round_up(pl.cdiv(B, 2), 8))
    while tb > 8 and _vmem_bytes(tb, C) > _VMEM_SOFT_CAP:
        tb = _round_up(tb // 2, 8)
    return max(tb, 8)


def cbm_forward(pooled, kp, *, block_b=1024):
    """pooled: [B, C] f32 -> (logits [B,1] f32, concepts [B,NUM_CONCEPTS] f32)."""
    B, C = pooled.shape
    TB = _choose_tb(B, C, block_b)
    grid = (pl.cdiv(B, TB),)

    vmem_limit = int(min(max(2 * _vmem_bytes(TB, C), 32 * 1024 * 1024),
                         48 * 1024 * 1024))

    batch_map = lambda i: (i, 0)
    const2 = lambda i: (0, 0)
    const3 = lambda i: (0, 0, 0)
    resident = pl.Buffered(1)   # constant blocks: no double buffer, single resident copy

    in_specs = [
        pl.BlockSpec((TB, C), batch_map),                                    # pooled (streamed)
        pl.BlockSpec((C, FEAT_DIM), const2, pipeline_mode=resident),         # w_enc  (resident)
        pl.BlockSpec((FEAT_DIM, HIDDEN_CP), const2, pipeline_mode=resident), # w1
        pl.BlockSpec((3, LANE, LANE), const3, pipeline_mode=resident),       # w2/w3/w4 stack
        pl.BlockSpec((4, LANE), const2, pipeline_mode=resident),             # b1..b4 stack
    ]
    out_specs = pl.BlockSpec((TB, LANE), batch_map)

    fused = pl.pallas_call(
        _cbm_kernel,
        out_shape=jax.ShapeDtypeStruct((B, LANE), jnp.bfloat16),
        grid=grid,
        in_specs=in_specs,
        out_specs=out_specs,
        compiler_params=pltpu.CompilerParams(
            dimension_semantics=("parallel",),
            vmem_limit_bytes=vmem_limit),
    )(pooled.astype(jnp.bfloat16),
      kp["w_enc"], kp["w1"], kp["w_stack"], kp["bias"])

    concepts = fused[:, :NUM_CONCEPTS].astype(jnp.float32)
    logits = fused[:, LOGIT_LANE:LOGIT_LANE + 1].astype(jnp.float32)
    return logits, concepts


def init_params(key, in_channels):
    """Logical (unpadded, f32) parameters matching the nn.Linear shapes in __init__."""
    ks = jax.random.split(key, 10)

    def lin(kw, kb, fan_in, fan_out):
        # uniform(-1/sqrt(fan_in), 1/sqrt(fan_in)), like torch Linear default.
        bound = 1.0 / jnp.sqrt(fan_in)
        w = jax.random.uniform(kw, (fan_in, fan_out), jnp.float32, -bound, bound)
        b = jax.random.uniform(kb, (1, fan_out), jnp.float32, -bound, bound)
        return w, b

    w1, b1 = lin(ks[0], ks[1], FEAT_DIM, HIDDEN_CP)       # Linear(512, 128)
    w2, b2 = lin(ks[2], ks[3], HIDDEN_CP, NUM_CONCEPTS)   # Linear(128, 10)
    w3, b3 = lin(ks[4], ks[5], NUM_CONCEPTS, HIDDEN_CLS)  # Linear(10, 32)
    w4, b4 = lin(ks[6], ks[7], HIDDEN_CLS, 1)             # Linear(32, 1)
    # Synthetic-encoder projection weight generated once here (hoisted out of forward).
    bound = 1.0 / jnp.sqrt(in_channels)
    w_enc = jax.random.uniform(ks[8], (in_channels, FEAT_DIM), jnp.float32, -bound, bound)
    return {"w1": w1, "b1": b1, "w2": w2, "b2": b2,
            "w3": w3, "b3": b3, "w4": w4, "b4": b4, "w_enc": w_enc}


def prepare_kernel_params(p):
    """Pad / cast / pack logical params into tile-friendly kernel shapes (done once)."""
    # Zero-padded 128x128 tiles.  Invariant required for correctness: rows of w3 at
    # index >= NUM_CONCEPTS stay zero so the sigmoid(0)=0.5 padding lanes cancel.
    w2 = jnp.zeros((HIDDEN_CP, LANE), jnp.float32).at[:, :NUM_CONCEPTS].set(p["w2"])
    w3 = jnp.zeros((LANE, LANE), jnp.float32).at[:NUM_CONCEPTS, :HIDDEN_CLS].set(p["w3"])
    # Single logit column placed at lane LOGIT_LANE (plain lane-select, no shuffle).
    w4 = jnp.zeros((LANE, LANE), jnp.float32).at[:HIDDEN_CLS, LOGIT_LANE].set(p["w4"][:, 0])
    w_stack = jnp.stack([w2, w3, w4], axis=0).astype(jnp.bfloat16)        # [3, 128, 128]

    bias = jnp.zeros((4, LANE), jnp.float32)
    bias = bias.at[0, :HIDDEN_CP].set(p["b1"][0])
    bias = bias.at[1, :NUM_CONCEPTS].set(p["b2"][0])
    bias = bias.at[2, :HIDDEN_CLS].set(p["b3"][0])
    bias = bias.at[3, LOGIT_LANE].set(p["b4"][0, 0])

    return {
        "w_enc": p["w_enc"].astype(jnp.bfloat16),   # bf16 MXU path, f32 accumulation
        "w1": p["w1"].astype(jnp.bfloat16),
        "w_stack": w_stack,
        "bias": bias,                               # biases kept f32 (VPU adds)
    }


def model_forward(x, kparams):
    """x: NCHW image batch -> (logits [B,1], concepts [B,NUM_CONCEPTS])."""
    # Stand-in encoder front half (global average pool) kept as trivial JAX glue;
    # the projection + all MLPs run inside the Pallas kernel.
    pooled = jnp.mean(x, axis=(2, 3))                     # [B, C]
    return cbm_forward(pooled, kparams)


if __name__ == "__main__":
    key = jax.random.PRNGKey(0)
    k_x, k_p = jax.random.split(key)

    B, C, H, W = 2, 4, 16, 16
    x = jax.random.normal(k_x, (B, C, H, W), jnp.float32)

    params = init_params(k_p, C)              # logical f32 params (reference)
    kparams = prepare_kernel_params(params)   # padded / packed / bf16 kernel params

    logits, concepts = model_forward(x, kparams)
    jax.block_until_ready((logits, concepts))

    # Reference check against the plain-JAX f32 path (true module semantics).
    pooled = jnp.mean(x, axis=(2, 3))
    feat = jnp.maximum(pooled @ params["w_enc"], 0.0)
    h1 = jnp.maximum(feat @ params["w1"] + params["b1"], 0.0)
    concepts_ref = jax.nn.sigmoid(h1 @ params["w2"] + params["b2"])
    h2 = jnp.maximum(concepts_ref @ params["w3"] + params["b3"], 0.0)
    logits_ref = h2 @ params["w4"] + params["b4"]

    assert logits.shape == (B, 1) and concepts.shape == (B, NUM_CONCEPTS)
    # Tolerance sized for the bf16 MXU path (f32 accumulation) + bf16 output slab.
    assert jnp.allclose(logits, logits_ref, atol=2e-2, rtol=2e-2)
    assert jnp.allclose(concepts, concepts_ref, atol=2e-2, rtol=2e-2)

    print("KERNEL_OK")
</pallas_src>

<mosaic_0001>
module attributes {stable_mosaic.version = 11 : i64} {
  func.func @_cbm_kernel(%arg0: i32, %arg1: memref<2x4xbf16, #tpu.memory_space<vmem>>, %arg2: memref<4x512xbf16, #tpu.memory_space<vmem>>, %arg3: memref<512x128xbf16, #tpu.memory_space<vmem>>, %arg4: memref<3x128x128xbf16, #tpu.memory_space<vmem>>, %arg5: memref<4x128xf32, #tpu.memory_space<vmem>>, %arg6: memref<2x128xbf16, #tpu.memory_space<vmem>>) attributes {dimension_semantics = [#tpu.dimension_semantics<parallel>], iteration_bounds = array<i64: 1>, scalar_prefetch = 0 : i64, scratch_operands = 0 : i64, tpu.core_type = #tpu.core_type<tc>, window_params = [{transform_indices = @transform_0, window_bounds = array<i64: 2, 4>}, {pipeline_mode = #tpu.pipeline_mode<synchronous>, transform_indices = @transform_1, window_bounds = array<i64: 4, 512>}, {pipeline_mode = #tpu.pipeline_mode<synchronous>, transform_indices = @transform_2, window_bounds = array<i64: 512, 128>}, {pipeline_mode = #tpu.pipeline_mode<synchronous>, transform_indices = @transform_3, window_bounds = array<i64: 3, 128, 128>}, {pipeline_mode = #tpu.pipeline_mode<synchronous>, transform_indices = @transform_4, window_bounds = array<i64: 4, 128>}, {transform_indices = @transform_5, window_bounds = array<i64: 2, 128>}]} {
    %c0 = arith.constant 0 : index
    %c0_0 = arith.constant 0 : index
    %0 = vector.load %arg1[%c0, %c0_0] : memref<2x4xbf16, #tpu.memory_space<vmem>>, vector<2x4xbf16>
    %c0_1 = arith.constant 0 : index
    %c0_2 = arith.constant 0 : index
    %1 = vector.load %arg2[%c0_1, %c0_2] : memref<4x512xbf16, #tpu.memory_space<vmem>>, vector<4x512xbf16>
    %cst = arith.constant dense<0.000000e+00> : vector<2x512xf32>
    %2 = tpu.matmul %0, %1, %cst {dimension_numbers = #tpu.dot_dimension_numbers<[1], [0], [0], [1], [0, 0, 1, 1], [], []>} : vector<2x4xbf16>, vector<4x512xbf16>, vector<2x512xf32> -> vector<2x512xf32>
    %cst_3 = arith.constant 0.000000e+00 : f32
    %3 = vector.broadcast %cst_3 : f32 to vector<2x512xf32>
    %4 = arith.maximumf %2, %3 : vector<2x512xf32>
    %5 = arith.truncf %4 : vector<2x512xf32> to vector<2x512xbf16>
    %c0_4 = arith.constant 0 : index
    %c0_5 = arith.constant 0 : index
    %6 = vector.load %arg5[%c0_4, %c0_5] : memref<4x128xf32, #tpu.memory_space<vmem>>, vector<1x128xf32>
    %c1 = arith.constant 1 : index
    %c0_6 = arith.constant 0 : index
    %7 = vector.load %arg5[%c1, %c0_6] : memref<4x128xf32, #tpu.memory_space<vmem>>, vector<1x128xf32>
    %c2 = arith.constant 2 : index
    %c0_7 = arith.constant 0 : index
    %8 = vector.load %arg5[%c2, %c0_7] : memref<4x128xf32, #tpu.memory_space<vmem>>, vector<1x128xf32>
    %c3 = arith.constant 3 : index
    %c0_8 = arith.constant 0 : index
    %9 = vector.load %arg5[%c3, %c0_8] : memref<4x128xf32, #tpu.memory_space<vmem>>, vector<1x128xf32>
    %c0_9 = arith.constant 0 : index
    %c0_10 = arith.constant 0 : index
    %10 = vector.load %arg3[%c0_9, %c0_10] : memref<512x128xbf16, #tpu.memory_space<vmem>>, vector<512x128xbf16>
    %cst_11 = arith.constant dense<0.000000e+00> : vector<2x128xf32>
    %11 = tpu.matmul %5, %10, %cst_11 {dimension_numbers = #tpu.dot_dimension_numbers<[1], [0], [0], [1], [0, 0, 1, 1], [], []>} : vector<2x512xbf16>, vector<512x128xbf16>, vector<2x128xf32> -> vector<2x128xf32>
    %12 = vector.broadcast %6 : vector<1x128xf32> to vector<2x128xf32>
    %13 = arith.addf %11, %12 : vector<2x128xf32>
    %cst_12 = arith.constant 0.000000e+00 : f32
    %14 = vector.broadcast %cst_12 : f32 to vector<2x128xf32>
    %15 = arith.maximumf %13, %14 : vector<2x128xf32>
    %16 = arith.truncf %15 : vector<2x128xf32> to vector<2x128xbf16>
    %c0_13 = arith.constant 0 : index
    %c0_14 = arith.constant 0 : index
    %c0_15 = arith.constant 0 : index
    %17 = vector.load %arg4[%c0_13, %c0_14, %c0_15] : memref<3x128x128xbf16, #tpu.memory_space<vmem>>, vector<1x128x128xbf16>
    %18 = vector.shape_cast %17 : vector<1x128x128xbf16> to vector<128x128xbf16>
    %cst_16 = arith.constant dense<0.000000e+00> : vector<2x128xf32>
    %19 = tpu.matmul %16, %18, %cst_16 {dimension_numbers = #tpu.dot_dimension_numbers<[1], [0], [0], [1], [0, 0, 1, 1], [], []>} : vector<2x128xbf16>, vector<128x128xbf16>, vector<2x128xf32> -> vector<2x128xf32>
    %20 = vector.broadcast %7 : vector<1x128xf32> to vector<2x128xf32>
    %21 = arith.addf %19, %20 : vector<2x128xf32>
    %22 = arith.negf %21 : vector<2x128xf32>
    %23 = math.exp %22 : vector<2x128xf32>
    %cst_17 = arith.constant 1.000000e+00 : f32
    %24 = vector.broadcast %cst_17 : f32 to vector<2x128xf32>
    %25 = arith.addf %24, %23 : vector<2x128xf32>
    %26 = arith.divf %24, %25 : vector<2x128xf32>
    %27 = arith.truncf %26 : vector<2x128xf32> to vector<2x128xbf16>
    %c1_18 = arith.constant 1 : index
    %c0_19 = arith.constant 0 : index
    %c0_20 = arith.constant 0 : index
    %28 = vector.load %arg4[%c1_18, %c0_19, %c0_20] : memref<3x128x128xbf16, #tpu.memory_space<vmem>>, vector<1x128x128xbf16>
    %29 = vector.shape_cast %28 : vector<1x128x128xbf16> to vector<128x128xbf16>
    %cst_21 = arith.constant dense<0.000000e+00> : vector<2x128xf32>
    %30 = tpu.matmul %27, %29, %cst_21 {dimension_numbers = #tpu.dot_dimension_numbers<[1], [0], [0], [1], [0, 0, 1, 1], [], []>} : vector<2x128xbf16>, vector<128x128xbf16>, vector<2x128xf32> -> vector<2x128xf32>
    %31 = vector.broadcast %8 : vector<1x128xf32> to vector<2x128xf32>
    %32 = arith.addf %30, %31 : vector<2x128xf32>
    %cst_22 = arith.constant 0.000000e+00 : f32
    %33 = vector.broadcast %cst_22 : f32 to vector<2x128xf32>
    %34 = arith.maximumf %32, %33 : vector<2x128xf32>
    %35 = arith.truncf %34 : vector<2x128xf32> to vector<2x128xbf16>
    %c2_23 = arith.constant 2 : index
    %c0_24 = arith.constant 0 : index
    %c0_25 = arith.constant 0 : index
    %36 = vector.load %arg4[%c2_23, %c0_24, %c0_25] : memref<3x128x128xbf16, #tpu.memory_space<vmem>>, vector<1x128x128xbf16>
    %37 = vector.shape_cast %36 : vector<1x128x128xbf16> to vector<128x128xbf16>
    %cst_26 = arith.constant dense<0.000000e+00> : vector<2x128xf32>
    %38 = tpu.matmul %35, %37, %cst_26 {dimension_numbers = #tpu.dot_dimension_numbers<[1], [0], [0], [1], [0, 0, 1, 1], [], []>} : vector<2x128xbf16>, vector<128x128xbf16>, vector<2x128xf32> -> vector<2x128xf32>
    %39 = vector.broadcast %9 : vector<1x128xf32> to vector<2x128xf32>
    %40 = arith.addf %38, %39 : vector<2x128xf32>
    %41 = tpu.iota {dimensions = array<i32: 1>} : vector<1x128xi32>
    %c10_i32 = arith.constant 10 : i32
    %42 = vector.broadcast %c10_i32 : i32 to vector<1x128xi32>
    %43 = arith.cmpi slt, %41, %42 : vector<1x128xi32>
    %44 = vector.shape_cast %43 : vector<1x128xi1> to vector<1x128xi1>
    %45 = vector.broadcast %44 : vector<1x128xi1> to vector<2x128xi1>
    %46 = arith.select %45, %26, %40 : vector<2x128xi1>, vector<2x128xf32>
    %47 = arith.truncf %46 : vector<2x128xf32> to vector<2x128xbf16>
    %c0_27 = arith.constant 0 : index
    %c0_28 = arith.constant 0 : index
    %48 = vector.load %arg6[%c0_27, %c0_28] : memref<2x128xbf16, #tpu.memory_space<vmem>>, vector<2x128xbf16>
    tpu.vector_store %arg6[%c0_27, %c0_28], %47 {strides = array<i32>} : memref<2x128xbf16, #tpu.memory_space<vmem>>, vector<2x128xbf16>,
    return
  }
  func.func @transform_0(%arg0: i32) -> (i32, i32) {
    %c0_i32 = arith.constant 0 : i32
    %c0_i32_0 = arith.constant 0 : i32
    return %arg0, %c0_i32 : i32, i32
  }
  func.func @transform_1(%arg0: i32) -> (i32, i32) {
    %c0_i32 = arith.constant 0 : i32
    %c0_i32_0 = arith.constant 0 : i32
    %c0_i32_1 = arith.constant 0 : i32
    return %c0_i32, %c0_i32_0 : i32, i32
  }
  func.func @transform_2(%arg0: i32) -> (i32, i32) {
    %c0_i32 = arith.constant 0 : i32
    %c0_i32_0 = arith.constant 0 : i32
    %c0_i32_1 = arith.constant 0 : i32
    return %c0_i32, %c0_i32_0 : i32, i32
  }
  func.func @transform_3(%arg0: i32) -> (i32, i32, i32) {
    %c0_i32 = arith.constant 0 : i32
    %c0_i32_0 = arith.constant 0 : i32
    %c0_i32_1 = arith.constant 0 : i32
    %c0_i32_2 = arith.constant 0 : i32
    return %c0_i32, %c0_i32_0, %c0_i32_1 : i32, i32, i32
  }
  func.func @transform_4(%arg0: i32) -> (i32, i32) {
    %c0_i32 = arith.constant 0 : i32
    %c0_i32_0 = arith.constant 0 : i32
    %c0_i32_1 = arith.constant 0 : i32
    return %c0_i32, %c0_i32_0 : i32, i32
  }
  func.func @transform_5(%arg0: i32) -> (i32, i32) {
    %c0_i32 = arith.constant 0 : i32
    %c0_i32_0 = arith.constant 0 : i32
    return %arg0, %c0_i32 : i32, i32
  }
}

</mosaic_0001>

<llo_original>
// kernel: tpu_custom_call.1
$region0: #{tpu_custom_call.1}
  #allocation0 [shape = 'u32[]', space=smem, size = 0x4, offset = 0x4, fixed_abs, tag = 'smem constant byte address 0x4 - core index']
  #allocation1 [shape = 'u32[72,128]{1,0:T(1,128)}', space=vmem, size = 0x9000, scoped, tag = 'internal scratch']
  %s0 = inlined_call_operand.hbm [shape: bf16[2,4], index: 0, kind: input, shape index: {}]
  %s1 = inlined_call_operand.hbm [shape: bf16[4,512], index: 1, kind: input, shape index: {}]
  %s2 = inlined_call_operand.hbm [shape: bf16[512,128], index: 2, kind: input, shape index: {}]
  %s3 = inlined_call_operand.hbm [shape: bf16[3,128,128], index: 3, kind: input, shape index: {}]
  %s4 = inlined_call_operand.hbm [shape: f32[4,128], index: 4, kind: input, shape index: {}]
  %s5 = inlined_call_operand.hbm [shape: bf16[2,128], index: 5, kind: output, shape index: {}]
  %s6 = sld [smem:[#allocation0]]
  $region50: #{tpu_custom_call.1} parent=0
    _
  %s8 = ssub.s32 1, %s6
  %s9 = scalar_select 0, %s8, %s6
  $region1: #{tpu_custom_call.1} parent=0
    #allocation2 [shape = 'u8[512]{0}', space=vmem, size = 0x400, scoped, tag = 'input window, operand 0, single buffered']
    #allocation3 [shape = 's32[1]{0}', space=sflag, size = 0x4, scoped, tag = 'scoped memory for tpu_custom_call.1']
    #allocation4 [shape = 's32[1]{0}', space=sflag, size = 0x4, scoped, tag = 'scoped memory for tpu_custom_call.1']
    #allocation5 [shape = 'u8[4096]{0}', space=vmem, size = 0x1000, scoped, tag = 'input window, operand 1, single buffered']
    #allocation6 [shape = 's32[1]{0}', space=sflag, size = 0x4, scoped, tag = 'scoped memory for tpu_custom_call.1']
    #allocation7 [shape = 'u8[131072]{0}', space=vmem, size = 0x20000, scoped, tag = 'input window, operand 2, single buffered']
    #allocation8 [shape = 'u8[98304]{0}', space=vmem, size = 0x18000, scoped, tag = 'input window, operand 3, single buffered']
    #allocation9 [shape = 's32[1]{0}', space=sflag, size = 0x4, scoped, tag = 'scoped memory for tpu_custom_call.1']
    #allocation10 [shape = 'u8[2048]{0}', space=vmem, size = 0x800, scoped, tag = 'input window, operand 4, single buffered']
    #allocation11 [shape = 'u8[512]{0}', space=vmem, size = 0x400, scoped, tag = 'output window, operand 0, single buffered']
    %10 = vsyncpa [#allocation3], 0
    %11 = vsyncpa [#allocation6], 0
    %12 = vsyncpa [#allocation9], 0
    %13 = vsyncpa [#allocation4], 0
    // Predicated region
    $region2: #{tpu_custom_call.1} parent=1 // pred_check
      _
    $region3: #{tpu_custom_call.1} parent=1 // pred_check_branch
      %15 = sbr.rel (0) target = $region5
    $region4: #{tpu_custom_call.1} parent=1 // pred_region
      %17 = vsyncadd [#allocation3], 0
      %s19 = sshll.u32 %s0, 4
      %s20 = int_to_ptr.hbm [resolvable:$true] %s19
      %s21 = sshll.u32 [#allocation2], 4
      %s22 = int_to_ptr.vmem [resolvable:$true] %s21
      %24 = dma.hbm_to_vmem [thread:$0]  %s20, 16, %s22, [#allocation3]
    $region5: #{tpu_custom_call.1} parent=1 // pred_fallthru
      _
    // Predicated region
    $region6: #{tpu_custom_call.1} parent=1 // pred_check
      _
    $region7: #{tpu_custom_call.1} parent=1 // pred_check_branch
      %26 = sbr.rel (0) target = $region9
    $region8: #{tpu_custom_call.1} parent=1 // pred_region
      %28 = vsyncadd [#allocation6], 0
      %s30 = sshll.u32 %s1, 4
      %s31 = int_to_ptr.hbm [resolvable:$true] %s30
      %s32 = sshll.u32 [#allocation5], 4
      %s33 = int_to_ptr.vmem [resolvable:$true] %s32
      %35 = dma.hbm_to_vmem [thread:$0]  %s31, 128, %s33, [#allocation6]
    $region9: #{tpu_custom_call.1} parent=1 // pred_fallthru
      _
    // Predicated region
    $region10: #{tpu_custom_call.1} parent=1 // pred_check
      _
    $region11: #{tpu_custom_call.1} parent=1 // pred_check_branch
      %37 = sbr.rel (0) target = $region13
    $region12: #{tpu_custom_call.1} parent=1 // pred_region
      %39 = vsyncadd [#allocation6], 0
      %s40 = sshll.u32 %s2, 4
      %s41 = int_to_ptr.hbm [resolvable:$true] %s40
      %s42 = sshll.u32 [#allocation7], 4
      %s43 = int_to_ptr.vmem [resolvable:$true] %s42
      %48 = dma.hbm_to_vmem [thread:$0]  %s41, 4096, %s43, [#allocation6], 64, 64, 4
    $region13: #{tpu_custom_call.1} parent=1 // pred_fallthru
      _
    // Predicated region
    $region14: #{tpu_custom_call.1} parent=1 // pred_check
      _
    $region15: #{tpu_custom_call.1} parent=1 // pred_check_branch
      %50 = sbr.rel (0) target = $region17
    $region16: #{tpu_custom_call.1} parent=1 // pred_region
      %52 = vsyncadd [#allocation9], 0
      %s53 = sshll.u32 %s3, 4
      %s54 = int_to_ptr.hbm [resolvable:$true] %s53
      %s55 = sshll.u32 [#allocation8], 4
      %s56 = int_to_ptr.vmem [resolvable:$true] %s55
      %61 = dma.hbm_to_vmem [thread:$0]  %s54, 3072, %s56, [#allocation9], 64, 64, 4
    $region17: #{tpu_custom_call.1} parent=1 // pred_fallthru
      _
    // Predicated region
    $region18: #{tpu_custom_call.1} parent=1 // pred_check
      _
    $region19: #{tpu_custom_call.1} parent=1 // pred_check_branch
      %63 = sbr.rel (0) target = $region21
    $region20: #{tpu_custom_call.1} parent=1 // pred_region
      %65 = vsyncadd [#allocation9], 0
      %s67 = sshll.u32 %s4, 4
      %s68 = int_to_ptr.hbm [resolvable:$true] %s67
      %s69 = sshll.u32 [#allocation10], 4
      %s70 = int_to_ptr.vmem [resolvable:$true] %s69
      %72 = dma.hbm_to_vmem [thread:$0]  %s68, 64, %s70, [#allocation9]
    $region21: #{tpu_custom_call.1} parent=1 // pred_fallthru
      _
    // Predicated region
    $region22: #{tpu_custom_call.1} parent=1 // pred_check
      _
    $region23: #{tpu_custom_call.1} parent=1 // pred_check_branch
      %74 = sbr.rel (0) target = $region25
    $region24: #{tpu_custom_call.1} parent=1 // pred_region
      %76 = dma.done [#allocation3], 16
    $region25: #{tpu_custom_call.1} parent=1 // pred_fallthru
      _
    // Predicated region
    $region26: #{tpu_custom_call.1} parent=1 // pred_check
      _
    $region27: #{tpu_custom_call.1} parent=1 // pred_check_branch
      %78 = sbr.rel (0) target = $region29
    $region28: #{tpu_custom_call.1} parent=1 // pred_region
      %80 = dma.done [#allocation6], 128
    $region29: #{tpu_custom_call.1} parent=1 // pred_fallthru
      _
    // Predicated region
    $region30: #{tpu_custom_call.1} parent=1 // pred_check
      _
    $region31: #{tpu_custom_call.1} parent=1 // pred_check_branch
      %82 = sbr.rel (0) target = $region33
    $region32: #{tpu_custom_call.1} parent=1 // pred_region
      %84 = dma.done [#allocation6], 4096
    $region33: #{tpu_custom_call.1} parent=1 // pred_fallthru
      _
    // Predicated region
    $region34: #{tpu_custom_call.1} parent=1 // pred_check
      _
    $region35: #{tpu_custom_call.1} parent=1 // pred_check_branch
      %86 = sbr.rel (0) target = $region37
    $region36: #{tpu_custom_call.1} parent=1 // pred_region
      %88 = dma.done [#allocation9], 3072
    $region37: #{tpu_custom_call.1} parent=1 // pred_fallthru
      _
    // Predicated region
    $region38: #{tpu_custom_call.1} parent=1 // pred_check
      _
    $region39: #{tpu_custom_call.1} parent=1 // pred_check_branch
      %90 = sbr.rel (0) target = $region41
    $region40: #{tpu_custom_call.1} parent=1 // pred_region
      %92 = dma.done [#allocation9], 64
    $region41: #{tpu_custom_call.1} parent=1 // pred_fallthru
      _
    %v94 = vld [vmem:[#allocation2] sm:$0x1]
    %v95 = vld [vmem:[#allocation5] sm:$0xff]
    %97 = vst [vmem:[#allocation1] ss:$4 sm:$0xff] %v95
    %v98 = vld.sshfl [vmem:[#allocation1] sm:$0xff pattern:$0x73625140]
    %v99 = vld.sshfl [vmem:[#allocation1 + $0x8] sm:$0xff pattern:$0x73625140]
    %v100 = vld.sshfl [vmem:[#allocation1 + $0x10] sm:$0xff pattern:$0x73625140]
    %v101 = vld.sshfl [vmem:[#allocation1 + $0x18] sm:$0xff pattern:$0x73625140]
    %vm102 = vcmask 31744
    %v104 = vsel %vm102, %v94, 0
    %vm106 = vcmask 1041408
    %v107 = vsel %vm106, %v98, 0
    %v109 = vsel %vm106, %v99, 0
    %v111 = vsel %vm106, %v100, 0
    %v113 = vsel %vm106, %v101, 0
    %115 = vmatpush.bf16.msra.mxu0 0
    %116 = vmatpush.bf16.msra.mxu0 0
    %117 = vmatpush.bf16.msra.mxu0 0
    %118 = vmatpush.bf16.msra.mxu0 0
    %119 = vmatpush.bf16.msra.mxu0 0
    %120 = vmatpush.bf16.msra.mxu0 0
    %121 = vmatpush.bf16.msra.mxu0 0
    %122 = vmatpush.bf16.msra.mxu0 %v107
    %123 = vmatmul.bf16.gmra.mxu0 %v104
    %v124 = vpop.f32.mrf.mxu0
    %v125 = vadd.f32 0.0, %v124
    %v126 = vpop.f32.mrf.mxu0
    %127 = vdwg.mxu0
    %128 = vmatpush.bf16.msra.mxu0 0
    %129 = vmatpush.bf16.msra.mxu0 0
    %130 = vmatpush.bf16.msra.mxu0 0
    %131 = vmatpush.bf16.msra.mxu0 0
    %132 = vmatpush.bf16.msra.mxu0 0
    %133 = vmatpush.bf16.msra.mxu0 0
    %134 = vmatpush.bf16.msra.mxu0 0
    %135 = vmatpush.bf16.msra.mxu0 %v109
    %136 = vmatmul.bf16.gmra.mxu0 %v104
    %v137 = vpop.f32.mrf.mxu0
    %v138 = vadd.f32 0.0, %v137
    %v139 = vpop.f32.mrf.mxu0
    %140 = vdwg.mxu0
    %141 = vmatpush.bf16.msra.mxu0 0
    %142 = vmatpush.bf16.msra.mxu0 0
    %143 = vmatpush.bf16.msra.mxu0 0
    %144 = vmatpush.bf16.msra.mxu0 0
    %145 = vmatpush.bf16.msra.mxu0 0
    %146 = vmatpush.bf16.msra.mxu0 0
    %147 = vmatpush.bf16.msra.mxu0 0
    %148 = vmatpush.bf16.msra.mxu0 %v111
    %149 = vmatmul.bf16.gmra.mxu0 %v104
    %v150 = vpop.f32.mrf.mxu0
    %v151 = vadd.f32 0.0, %v150
    %v152 = vpop.f32.mrf.mxu0
    %153 = vdwg.mxu0
    %154 = vmatpush.bf16.msra.mxu0 0
    %155 = vmatpush.bf16.msra.mxu0 0
    %156 = vmatpush.bf16.msra.mxu0 0
    %157 = vmatpush.bf16.msra.mxu0 0
    %158 = vmatpush.bf16.msra.mxu0 0
    %159 = vmatpush.bf16.msra.mxu0 0
    %160 = vmatpush.bf16.msra.mxu0 0
    %161 = vmatpush.bf16.msra.mxu0 %v113
    %162 = vmatmul.bf16.gmra.mxu0 %v104
    %v163 = vpop.f32.mrf.mxu0
    %v164 = vadd.f32 0.0, %v163
    %v165 = vpop.f32.mrf.mxu0
    %166 = vdwg.mxu0
    %v167 = vmax.f32 %v125, 0.0
    %v168 = vmax.f32 %v138, 0.0
    %v169 = vmax.f32 %v151, 0.0
    %v170 = vmax.f32 %v164, 0.0
    %v171 = vpack.c.bf16 %v167, %v167
    %v172 = vpack.c.bf16 %v168, %v168
    %v173 = vpack.c.bf16 %v169, %v169
    %v174 = vpack.c.bf16 %v170, %v170
    %v175 = vld [vmem:[#allocation10] sm:$0x1]
    %v176 = vld [vmem:[#allocation10 + $0x1] sm:$0x1]
    %v177 = vld [vmem:[#allocation10 + $0x2] sm:$0x1]
    %v178 = vld [vmem:[#allocation10 + $0x3] sm:$0x1]
    %v179 = vld [vmem:[#allocation7] sm:$0xf]
    %v180 = vld [vmem:[#allocation7 + $0x4] sm:$0xf]
    %v181 = vld [vmem:[#allocation7 + $0x8] sm:$0xf]
    %v182 = vld [vmem:[#allocation7 + $0xc] sm:$0xf]
    %v183 = vld [vmem:[#allocation7 + $0x10] sm:$0xf]
    %v184 = vld [vmem:[#allocation7 + $0x14] sm:$0xf]
    %v185 = vld [vmem:[#allocation7 + $0x18] sm:$0xf]
    %v186 = vld [vmem:[#allocation7 + $0x1c] sm:$0xf]
    %v187 = vld [vmem:[#allocation7 + $0x20] sm:$0xf]
    %v188 = vld [vmem:[#allocation7 + $0x24] sm:$0xf]
    %v189 = vld [vmem:[#allocation7 + $0x28] sm:$0xf]
    %v190 = vld [vmem:[#allocation7 + $0x2c] sm:$0xf]
    %v191 = vld [vmem:[#allocation7 + $0x30] sm:$0xf]
    %v192 = vld [vmem:[#allocation7 + $0x34] sm:$0xf]
    %v193 = vld [vmem:[#allocation7 + $0x38] sm:$0xf]
    %v194 = vld [vmem:[#allocation7 + $0x3c] sm:$0xf]
    %v195 = vld [vmem:[#allocation7 + $0x40] sm:$0xf]
    %v196 = vld [vmem:[#allocation7 + $0x44] sm:$0xf]
    %v197 = vld [vmem:[#allocation7 + $0x48] sm:$0xf]
    %v198 = vld [vmem:[#allocation7 + $0x4c] sm:$0xf]
    %v199 = vld [vmem:[#allocation7 + $0x50] sm:$0xf]
    %v200 = vld [vmem:[#allocation7 + $0x54] sm:$0xf]
    %v201 = vld [vmem:[#allocation7 + $0x58] sm:$0xf]
    %v202 = vld [vmem:[#allocation7 + $0x5c] sm:$0xf]
    %v203 = vld [vmem:[#allocation7 + $0x60] sm:$0xf]
    %v204 = vld [vmem:[#allocation7 + $0x64] sm:$0xf]
    %v205 = vld [vmem:[#allocation7 + $0x68] sm:$0xf]
    %v206 = vld [vmem:[#allocation7 + $0x6c] sm:$0xf]
    %v207 = vld [vmem:[#allocation7 + $0x70] sm:$0xf]
    %v208 = vld [vmem:[#allocation7 + $0x74] sm:$0xf]
    %v209 = vld [vmem:[#allocation7 + $0x78] sm:$0xf]
    %v210 = vld [vmem:[#allocation7 + $0x7c] sm:$0xf]
    %v211 = vld [vmem:[#allocation7 + $0x80] sm:$0xf]
    %v212 = vld [vmem:[#allocation7 + $0x84] sm:$0xf]
    %v213 = vld [vmem:[#allocation7 + $0x88] sm:$0xf]
    %v214 = vld [vmem:[#allocation7 + $0x8c] sm:$0xf]
    %v215 = vld [vmem:[#allocation7 + $0x90] sm:$0xf]
    %v216 = vld [vmem:[#allocation7 + $0x94] sm:$0xf]
    %v217 = vld [vmem:[#allocation7 + $0x98] sm:$0xf]
    %v218 = vld [vmem:[#allocation7 + $0x9c] sm:$0xf]
    %v219 = vld [vmem:[#allocation7 + $0xa0] sm:$0xf]
    %v220 = vld [vmem:[#allocation7 + $0xa4] sm:$0xf]
    %v221 = vld [vmem:[#allocation7 + $0xa8] sm:$0xf]
    %v222 = vld [vmem:[#allocation7 + $0xac] sm:$0xf]
    %v223 = vld [vmem:[#allocation7 + $0xb0] sm:$0xf]
    %v224 = vld [vmem:[#allocation7 + $0xb4] sm:$0xf]
    %v225 = vld [vmem:[#allocation7 + $0xb8] sm:$0xf]
    %v226 = vld [vmem:[#allocation7 + $0xbc] sm:$0xf]
    %v227 = vld [vmem:[#allocation7 + $0xc0] sm:$0xf]
    %v228 = vld [vmem:[#allocation7 + $0xc4] sm:$0xf]
    %v229 = vld [vmem:[#allocation7 + $0xc8] sm:$0xf]
    %v230 = vld [vmem:[#allocation7 + $0xcc] sm:$0xf]
    %v231 = vld [vmem:[#allocation7 + $0xd0] sm:$0xf]
    %v232 = vld [vmem:[#allocation7 + $0xd4] sm:$0xf]
    %v233 = vld [vmem:[#allocation7 + $0xd8] sm:$0xf]
    %v234 = vld [vmem:[#allocation7 + $0xdc] sm:$0xf]
    %v235 = vld [vmem:[#allocation7 + $0xe0] sm:$0xf]
    %v236 = vld [vmem:[#allocation7 + $0xe4] sm:$0xf]
    %v237 = vld [vmem:[#allocation7 + $0xe8] sm:$0xf]
    %v238 = vld [vmem:[#allocation7 + $0xec] sm:$0xf]
    %v239 = vld [vmem:[#allocation7 + $0xf0] sm:$0xf]
    %v240 = vld [vmem:[#allocation7 + $0xf4] sm:$0xf]
    %v241 = vld [vmem:[#allocation7 + $0xf8] sm:$0xf]
    %v242 = vld [vmem:[#allocation7 + $0xfc] sm:$0xf]
    %v243 = vperm.slane %v175, 0
    %v308 = vunpack.c.l.b16 %v179
    %v309 = vunpack.c.l.b16 %v180
    %v310 = vunpack.c.l.b16 %v181
    %v311 = vunpack.c.l.b16 %v182
    %v312 = vunpack.c.l.b16 %v183
    %v313 = vunpack.c.l.b16 %v184
    %v314 = vunpack.c.l.b16 %v185
    %v315 = vunpack.c.l.b16 %v186
    %v316 = vunpack.c.l.b16 %v187
    %v317 = vunpack.c.l.b16 %v188
    %v318 = vunpack.c.l.b16 %v189
    %v319 = vunpack.c.l.b16 %v190
    %v320 = vunpack.c.l.b16 %v191
    %v321 = vunpack.c.l.b16 %v192
    %v322 = vunpack.c.l.b16 %v193
    %v323 = vunpack.c.l.b16 %v194
    %v324 = vunpack.c.l.b16 %v195
    %v325 = vunpack.c.l.b16 %v196
    %v326 = vunpack.c.l.b16 %v197
    %v327 = vunpack.c.l.b16 %v198
    %v328 = vunpack.c.l.b16 %v199
    %v329 = vunpack.c.l.b16 %v200
    %v330 = vunpack.c.l.b16 %v201
    %v331 = vunpack.c.l.b16 %v202
    %v332 = vunpack.c.l.b16 %v203
    %v333 = vunpack.c.l.b16 %v204
    %v334 = vunpack.c.l.b16 %v205
    %v335 = vunpack.c.l.b16 %v206
    %v336 = vunpack.c.l.b16 %v207
    %v337 = vunpack.c.l.b16 %v208
    %v338 = vunpack.c.l.b16 %v209
    %v339 = vunpack.c.l.b16 %v210
    %v340 = vunpack.c.l.b16 %v211
    %v341 = vunpack.c.l.b16 %v212
    %v342 = vunpack.c.l.b16 %v213
    %v343 = vunpack.c.l.b16 %v214
    %v344 = vunpack.c.l.b16 %v215
    %v345 = vunpack.c.l.b16 %v216
    %v346 = vunpack.c.l.b16 %v217
    %v347 = vunpack.c.l.b16 %v218
    %v348 = vunpack.c.l.b16 %v219
    %v349 = vunpack.c.l.b16 %v220
    %v350 = vunpack.c.l.b16 %v221
    %v351 = vunpack.c.l.b16 %v222
    %v352 = vunpack.c.l.b16 %v223
    %v353 = vunpack.c.l.b16 %v224
    %v354 = vunpack.c.l.b16 %v225
    %v355 = vunpack.c.l.b16 %v226
    %v356 = vunpack.c.l.b16 %v227
    %v357 = vunpack.c.l.b16 %v228
    %v358 = vunpack.c.l.b16 %v229
    %v359 = vunpack.c.l.b16 %v230
    %v360 = vunpack.c.l.b16 %v231
    %v361 = vunpack.c.l.b16 %v232
    %v362 = vunpack.c.l.b16 %v233
    %v363 = vunpack.c.l.b16 %v234
    %v364 = vunpack.c.l.b16 %v235
    %v365 = vunpack.c.l.b16 %v236
    %v366 = vunpack.c.l.b16 %v237
    %v367 = vunpack.c.l.b16 %v238
    %v368 = vunpack.c.l.b16 %v239
    %v369 = vunpack.c.l.b16 %v240
    %v370 = vunpack.c.l.b16 %v241
    %v371 = vunpack.c.l.b16 %v242
    %v372 = vpack.c.b16 %v309, %v308
    %v373 = vpack.c.b16 %v311, %v310
    %v374 = vpack.c.b16 %v313, %v312
    %v375 = vpack.c.b16 %v315, %v314
    %v376 = vpack.c.b16 %v317, %v316
    %v377 = vpack.c.b16 %v319, %v318
    %v378 = vpack.c.b16 %v321, %v320
    %v379 = vpack.c.b16 %v323, %v322
    %v380 = vpack.c.b16 %v325, %v324
    %v381 = vpack.c.b16 %v327, %v326
    %v382 = vpack.c.b16 %v329, %v328
    %v383 = vpack.c.b16 %v331, %v330
    %v384 = vpack.c.b16 %v333, %v332
    %v385 = vpack.c.b16 %v335, %v334
    %v386 = vpack.c.b16 %v337, %v336
    %v387 = vpack.c.b16 %v339, %v338
    %v388 = vpack.c.b16 %v341, %v340
    %v389 = vpack.c.b16 %v343, %v342
    %v390 = vpack.c.b16 %v345, %v344
    %v391 = vpack.c.b16 %v347, %v346
    %v392 = vpack.c.b16 %v349, %v348
    %v393 = vpack.c.b16 %v351, %v350
    %v394 = vpack.c.b16 %v353, %v352
    %v395 = vpack.c.b16 %v355, %v354
    %v396 = vpack.c.b16 %v357, %v356
    %v397 = vpack.c.b16 %v359, %v358
    %v398 = vpack.c.b16 %v361, %v360
    %v399 = vpack.c.b16 %v363, %v362
    %v400 = vpack.c.b16 %v365, %v364
    %v401 = vpack.c.b16 %v367, %v366
    %v402 = vpack.c.b16 %v369, %v368
    %v403 = vpack.c.b16 %v371, %v370
    %436 = vmatpush.bf16.msra.mxu0 %v379
    %437 = vmatpush.bf16.msra.mxu0 %v378
    %438 = vmatpush.bf16.msra.mxu0 %v377
    %439 = vmatpush.bf16.msra.mxu0 %v376
    %440 = vmatpush.bf16.msra.mxu0 %v375
    %441 = vmatpush.bf16.msra.mxu0 %v374
    %442 = vmatpush.bf16.msra.mxu0 %v373
    %443 = vmatpush.bf16.msra.mxu0 %v372
    %444 = vmatmul.bf16.gmra.mxu0 %v171
    %v445 = vpop.f32.mrf.mxu0
    %v446 = vadd.f32 %v243, %v445
    %v447 = vpop.f32.mrf.mxu0
    %448 = vdwg.mxu0
    %449 = vmatpush.bf16.msra.mxu0 %v387
    %450 = vmatpush.bf16.msra.mxu0 %v386
    %451 = vmatpush.bf16.msra.mxu0 %v385
    %452 = vmatpush.bf16.msra.mxu0 %v384
    %453 = vmatpush.bf16.msra.mxu0 %v383
    %454 = vmatpush.bf16.msra.mxu0 %v382
    %455 = vmatpush.bf16.msra.mxu0 %v381
    %456 = vmatpush.bf16.msra.mxu0 %v380
    %457 = vmatmul.bf16.gmra.mxu0 %v172
    %v458 = vpop.f32.mrf.mxu0
    %v459 = vadd.f32 %v446, %v458
    %v460 = vpop.f32.mrf.mxu0
    %461 = vdwg.mxu0
    %462 = vmatpush.bf16.msra.mxu0 %v395
    %463 = vmatpush.bf16.msra.mxu0 %v394
    %464 = vmatpush.bf16.msra.mxu0 %v393
    %465 = vmatpush.bf16.msra.mxu0 %v392
    %466 = vmatpush.bf16.msra.mxu0 %v391
    %467 = vmatpush.bf16.msra.mxu0 %v390
    %468 = vmatpush.bf16.msra.mxu0 %v389
    %469 = vmatpush.bf16.msra.mxu0 %v388
    %470 = vmatmul.bf16.gmra.mxu0 %v173
    %v471 = vpop.f32.mrf.mxu0
    %v472 = vadd.f32 %v459, %v471
    %v473 = vpop.f32.mrf.mxu0
    %474 = vdwg.mxu0
    %475 = vmatpush.bf16.msra.mxu0 %v403
    %476 = vmatpush.bf16.msra.mxu0 %v402
    %477 = vmatpush.bf16.msra.mxu0 %v401
    %478 = vmatpush.bf16.msra.mxu0 %v400
    %479 = vmatpush.bf16.msra.mxu0 %v399
    %480 = vmatpush.bf16.msra.mxu0 %v398
    %481 = vmatpush.bf16.msra.mxu0 %v397
    %482 = vmatpush.bf16.msra.mxu0 %v396
    %483 = vmatmul.bf16.gmra.mxu0 %v174
    %v484 = vpop.f32.mrf.mxu0
    %v485 = vadd.f32 %v472, %v484
    %v486 = vpop.f32.mrf.mxu0
    %487 = vdwg.mxu0
    %v488 = vmax.f32 %v485, 0.0
    %v489 = vpack.c.bf16 %v488, %v488
    %v490 = vld [vmem:[#allocation8] sm:$0xf]
    %v491 = vld [vmem:[#allocation8 + $0x4] sm:$0xf]
    %v492 = vld [vmem:[#allocation8 + $0x8] sm:$0xf]
    %v493 = vld [vmem:[#allocation8 + $0xc] sm:$0xf]
    %v494 = vld [vmem:[#allocation8 + $0x10] sm:$0xf]
    %v495 = vld [vmem:[#allocation8 + $0x14] sm:$0xf]
    %v496 = vld [vmem:[#allocation8 + $0x18] sm:$0xf]
    %v497 = vld [vmem:[#allocation8 + $0x1c] sm:$0xf]
    %v498 = vld [vmem:[#allocation8 + $0x20] sm:$0xf]
    %v499 = vld [vmem:[#allocation8 + $0x24] sm:$0xf]
    %v500 = vld [vmem:[#allocation8 + $0x28] sm:$0xf]
    %v501 = vld [vmem:[#allocation8 + $0x2c] sm:$0xf]
    %v502 = vld [vmem:[#allocation8 + $0x30] sm:$0xf]
    %v503 = vld [vmem:[#allocation8 + $0x34] sm:$0xf]
    %v504 = vld [vmem:[#allocation8 + $0x38] sm:$0xf]
    %v505 = vld [vmem:[#allocation8 + $0x3c] sm:$0xf]
    %v506 = vperm.slane %v176, 0
    %v523 = vunpack.c.l.b16 %v490
    %v524 = vunpack.c.l.b16 %v491
    %v525 = vunpack.c.l.b16 %v492
    %v526 = vunpack.c.l.b16 %v493
    %v527 = vunpack.c.l.b16 %v494
    %v528 = vunpack.c.l.b16 %v495
    %v529 = vunpack.c.l.b16 %v496
    %v530 = vunpack.c.l.b16 %v497
    %v531 = vunpack.c.l.b16 %v498
    %v532 = vunpack.c.l.b16 %v499
    %v533 = vunpack.c.l.b16 %v500
    %v534 = vunpack.c.l.b16 %v501
    %v535 = vunpack.c.l.b16 %v502
    %v536 = vunpack.c.l.b16 %v503
    %v537 = vunpack.c.l.b16 %v504
    %v538 = vunpack.c.l.b16 %v505
    %v539 = vpack.c.b16 %v524, %v523
    %v540 = vpack.c.b16 %v526, %v525
    %v541 = vpack.c.b16 %v528, %v527
    %v542 = vpack.c.b16 %v530, %v529
    %v543 = vpack.c.b16 %v532, %v531
    %v544 = vpack.c.b16 %v534, %v533
    %v545 = vpack.c.b16 %v536, %v535
    %v546 = vpack.c.b16 %v538, %v537
    %555 = vmatpush.bf16.msra.mxu0 %v546
    %556 = vmatpush.bf16.msra.mxu0 %v545
    %557 = vmatpush.bf16.msra.mxu0 %v544
    %558 = vmatpush.bf16.msra.mxu0 %v543
    %559 = vmatpush.bf16.msra.mxu0 %v542
    %560 = vmatpush.bf16.msra.mxu0 %v541
    %561 = vmatpush.bf16.msra.mxu0 %v540
    %562 = vmatpush.bf16.msra.mxu0 %v539
    %563 = vmatmul.bf16.gmra.mxu0 %v489
    %v564 = vpop.f32.mrf.mxu0
    %v565 = vadd.f32 %v506, %v564
    %v566 = vpop.f32.mrf.mxu0
    %567 = vdwg.mxu0
    %v568 = vxor.u32 %v565, 2147483648
    %v569 = vmul.f32 %v568, 1.442695
    %v570 = vpow.pop %v569
    %v571 = vadd.f32 %v570, 1.0
    %v572 = vrcp.pop %v571
    %v573 = vmul.f32 %v571, %v572
    %v574 = vsub.f32 1.0, %v573
    %v575 = vmul.f32 %v572, %v574
    %v576 = vadd.f32 %v572, %v575
    %vm577 = vweird.f32 %v571
    %vm578 = vweird.f32 %v572
    %vm579 = vmor %vm577, %vm578
    %v580 = vsel %vm579, %v572, %v576
    %v581 = vand.u32 2147483647, %v571
    %vm582 = vcmp.eq.f32.partialorder %v581, 8.507059e+37
    %v583 = vand.u32 %v571, 2147483648
    %v584 = vor.u32 1.1754944e-38, %v583
    %v585 = vsel %vm582, %v584, %v580
    %v586 = vmul.f32 1.0, %v585
    %v587 = vpack.c.bf16 %v586, %v586
    %s588 = scalar_lea.vmem [#allocation8], 64
    %v589 = vld [vmem:[%s588] sm:$0xf]
    %v590 = vld [vmem:[%s588 + $0x4] sm:$0xf]
    %v591 = vld [vmem:[%s588 + $0x8] sm:$0xf]
    %v592 = vld [vmem:[%s588 + $0xc] sm:$0xf]
    %v593 = vld [vmem:[%s588 + $0x10] sm:$0xf]
    %v594 = vld [vmem:[%s588 + $0x14] sm:$0xf]
    %v595 = vld [vmem:[%s588 + $0x18] sm:$0xf]
    %v596 = vld [vmem:[%s588 + $0x1c] sm:$0xf]
    %v597 = vld [vmem:[%s588 + $0x20] sm:$0xf]
    %v598 = vld [vmem:[%s588 + $0x24] sm:$0xf]
    %v599 = vld [vmem:[%s588 + $0x28] sm:$0xf]
    %v600 = vld [vmem:[%s588 + $0x2c] sm:$0xf]
    %v601 = vld [vmem:[%s588 + $0x30] sm:$0xf]
    %v602 = vld [vmem:[%s588 + $0x34] sm:$0xf]
    %v603 = vld [vmem:[%s588 + $0x38] sm:$0xf]
    %v604 = vld [vmem:[%s588 + $0x3c] sm:$0xf]
    %v605 = vperm.slane %v177, 0
    %v622 = vunpack.c.l.b16 %v589
    %v623 = vunpack.c.l.b16 %v590
    %v624 = vunpack.c.l.b16 %v591
    %v625 = vunpack.c.l.b16 %v592
    %v626 = vunpack.c.l.b16 %v593
    %v627 = vunpack.c.l.b16 %v594
    %v628 = vunpack.c.l.b16 %v595
    %v629 = vunpack.c.l.b16 %v596
    %v630 = vunpack.c.l.b16 %v597
    %v631 = vunpack.c.l.b16 %v598
    %v632 = vunpack.c.l.b16 %v599
    %v633 = vunpack.c.l.b16 %v600
    %v634 = vunpack.c.l.b16 %v601
    %v635 = vunpack.c.l.b16 %v602
    %v636 = vunpack.c.l.b16 %v603
    %v637 = vunpack.c.l.b16 %v604
    %v638 = vpack.c.b16 %v623, %v622
    %v639 = vpack.c.b16 %v625, %v624
    %v640 = vpack.c.b16 %v627, %v626
    %v641 = vpack.c.b16 %v629, %v628
    %v642 = vpack.c.b16 %v631, %v630
    %v643 = vpack.c.b16 %v633, %v632
    %v644 = vpack.c.b16 %v635, %v634
    %v645 = vpack.c.b16 %v637, %v636
    %654 = vmatpush.bf16.msra.mxu0 %v645
    %655 = vmatpush.bf16.msra.mxu0 %v644
    %656 = vmatpush.bf16.msra.mxu0 %v643
    %657 = vmatpush.bf16.msra.mxu0 %v642
    %658 = vmatpush.bf16.msra.mxu0 %v641
    %659 = vmatpush.bf16.msra.mxu0 %v640
    %660 = vmatpush.bf16.msra.mxu0 %v639
    %661 = vmatpush.bf16.msra.mxu0 %v638
    %662 = vmatmul.bf16.gmra.mxu0 %v587
    %v663 = vpop.f32.mrf.mxu0
    %v664 = vadd.f32 %v605, %v663
    %v665 = vpop.f32.mrf.mxu0
    %666 = vdwg.mxu0
    %v667 = vmax.f32 %v664, 0.0
    %v668 = vpack.c.bf16 %v667, %v667
    %s669 = scalar_lea.vmem [#allocation8], 128
    %v670 = vld [vmem:[%s669] sm:$0xf]
    %v671 = vld [vmem:[%s669 + $0x4] sm:$0xf]
    %v672 = vld [vmem:[%s669 + $0x8] sm:$0xf]
    %v673 = vld [vmem:[%s669 + $0xc] sm:$0xf]
    %v674 = vld [vmem:[%s669 + $0x10] sm:$0xf]
    %v675 = vld [vmem:[%s669 + $0x14] sm:$0xf]
    %v676 = vld [vmem:[%s669 + $0x18] sm:$0xf]
    %v677 = vld [vmem:[%s669 + $0x1c] sm:$0xf]
    %v678 = vld [vmem:[%s669 + $0x20] sm:$0xf]
    %v679 = vld [vmem:[%s669 + $0x24] sm:$0xf]
    %v680 = vld [vmem:[%s669 + $0x28] sm:$0xf]
    %v681 = vld [vmem:[%s669 + $0x2c] sm:$0xf]
    %v682 = vld [vmem:[%s669 + $0x30] sm:$0xf]
    %v683 = vld [vmem:[%s669 + $0x34] sm:$0xf]
    %v684 = vld [vmem:[%s669 + $0x38] sm:$0xf]
    %v685 = vld [vmem:[%s669 + $0x3c] sm:$0xf]
    %v686 = vperm.slane %v178, 0
    %v703 = vunpack.c.l.b16 %v670
    %v704 = vunpack.c.l.b16 %v671
    %v705 = vunpack.c.l.b16 %v672
    %v706 = vunpack.c.l.b16 %v673
    %v707 = vunpack.c.l.b16 %v674
    %v708 = vunpack.c.l.b16 %v675
    %v709 = vunpack.c.l.b16 %v676
    %v710 = vunpack.c.l.b16 %v677
    %v711 = vunpack.c.l.b16 %v678
    %v712 = vunpack.c.l.b16 %v679
    %v713 = vunpack.c.l.b16 %v680
    %v714 = vunpack.c.l.b16 %v681
    %v715 = vunpack.c.l.b16 %v682
    %v716 = vunpack.c.l.b16 %v683
    %v717 = vunpack.c.l.b16 %v684
    %v718 = vunpack.c.l.b16 %v685
    %v719 = vpack.c.b16 %v704, %v703
    %v720 = vpack.c.b16 %v706, %v705
    %v721 = vpack.c.b16 %v708, %v707
    %v722 = vpack.c.b16 %v710, %v709
    %v723 = vpack.c.b16 %v712, %v711
    %v724 = vpack.c.b16 %v714, %v713
    %v725 = vpack.c.b16 %v716, %v715
    %v726 = vpack.c.b16 %v718, %v717
    %735 = vmatpush.bf16.msra.mxu0 %v726
    %736 = vmatpush.bf16.msra.mxu0 %v725
    %737 = vmatpush.bf16.msra.mxu0 %v724
    %738 = vmatpush.bf16.msra.mxu0 %v723
    %739 = vmatpush.bf16.msra.mxu0 %v722
    %740 = vmatpush.bf16.msra.mxu0 %v721
    %741 = vmatpush.bf16.msra.mxu0 %v720
    %742 = vmatpush.bf16.msra.mxu0 %v719
    %743 = vmatmul.bf16.gmra.mxu0 %v668
    %v744 = vpop.f32.mrf.mxu0
    %v745 = vadd.f32 %v686, %v744
    %v746 = vpop.f32.mrf.mxu0
    %747 = vdwg.mxu0
    %v748 = vlaneseq
    %v749 = vand.u32 %v748, 127
    %vm750 = vcmp.lt.s32.totalorder %v749, 10
    %v751 = vsel %vm750, 1, 0
    %vm752 = vcmp.eq.s32.totalorder %v751, 1
    %v753 = vsel %vm752, %v586, %v745
    %v754 = vpack.c.bf16 %v753, %v753
    %755 = vst [vmem:[#allocation11] sm:$0x1] %v754
    // Predicated region
    $region42: #{tpu_custom_call.1} parent=1 // pred_check
      _
    $region43: #{tpu_custom_call.1} parent=1 // pred_check_branch
      %757 = sbr.rel (0) target = $region45
    $region44: #{tpu_custom_call.1} parent=1 // pred_region
      %759 = vsyncadd [#allocation4], 0
      %s761 = sshll.u32 [#allocation11], 4
      %s762 = int_to_ptr.vmem [resolvable:$true] %s761
      %s763 = sshll.u32 %s5, 4
      %s764 = int_to_ptr.hbm [resolvable:$true] %s763
      %766 = dma.vmem_to_hbm [thread:$0]  %s762, 16, %s764, [#allocation4]
    $region45: #{tpu_custom_call.1} parent=1 // pred_fallthru
      _
    // Predicated region
    $region46: #{tpu_custom_call.1} parent=1 // pred_check
      _
    $region47: #{tpu_custom_call.1} parent=1 // pred_check_branch
      %768 = sbr.rel (0) target = $region49
    $region48: #{tpu_custom_call.1} parent=1 // pred_region
      %770 = dma.done [#allocation4], 16
    $region49: #{tpu_custom_call.1} parent=1 // pred_fallthru
      _
    %771 = vsyncpa [#allocation3], 1
    %772 = vsyncpa [#allocation6], 1
    %773 = vsyncpa [#allocation9], 1
    %774 = vsyncpa [#allocation4], 1

</llo_original>
